<compile_context>
chip_gen: v5e
topology: v5e:2x2
jax: 0.10.0
libtpu: 0.0.40
codegen_flags: <defaults>
</compile_context>

<pallas_src>
import jax
import jax.numpy as jnp
from jax.experimental import pallas as pl
from jax.experimental.pallas import tpu as pltpu


def _round_up(x, m):
    return ((x + m - 1) // m) * m


_VMEM_LIMIT_BYTES = 32 * 1024 * 1024     # explicit scoped-VMEM limit (safe on v5e/v6e/v7x)
_TILE_BUDGET_BYTES = 14 * 1024 * 1024    # target for the double-buffered working set
_RESIDENT_W_BYTES = 8 * 1024 * 1024      # max (double-buffered) bf16 weight slab kept resident
_FAST_PATH_MAX_ELEMS = 1 << 21           # B*K_pad*D below this -> plain XLA dot


def _fused_prototypes_kernel(x_ref, wt_ref, o_ref):
    # x_ref:  [tm, D]  f32   -- full contraction dim D in one block
    # wt_ref: [D, tn]  bf16  -- pre-transposed weights, K on the lane axis
    # o_ref:  [tm, tn]       -- lane-dense (tn multiple of 128) output tile
    x = x_ref[...].astype(wt_ref.dtype)          # in-kernel cast (hidden under MXU)
    o_ref[...] = jnp.dot(
        x, wt_ref[...], preferred_element_type=jnp.float32
    ).astype(o_ref.dtype)


def fused_prototypes_matmul(x, wt_pad, k_total, *, out_dtype=jnp.float32,
                            force_pallas=False):
    """x: [B, D] float32.  wt_pad: [D, K_pad] bf16, pre-transposed concat of
    all heads, K_pad % 128 == 0.  Returns [B, k_total] out_dtype."""
    B, D = x.shape
    D2, K_pad = wt_pad.shape
    assert D == D2, (D, D2)
    assert K_pad % 128 == 0 and k_total <= K_pad

    # Tiny-problem fast path: pallas_call fixed overhead dwarfs useful work.
    if (not force_pallas) and (B * K_pad * D < _FAST_PATH_MAX_ELEMS):
        out = jnp.dot(x.astype(wt_pad.dtype), wt_pad,
                      preferred_element_type=jnp.float32)
        return out[:, :k_total].astype(out_dtype)

    out_itemsize = jnp.dtype(out_dtype).itemsize

    # --- B tiling: sublane-aligned, single tile when B is small ---------
    B_al = _round_up(B, 8)
    tm = min(512, B_al)

    # --- K tiling: VMEM-resident full-K block when the slab is small ----
    w_bytes = 2 * wt_pad.size * wt_pad.dtype.itemsize   # double-buffered
    resident_w = w_bytes <= _RESIDENT_W_BYTES
    if resident_w:
        tn = K_pad
    else:
        tn = 128
        for cand in (1024, 512, 256, 128):
            if K_pad % cand == 0:
                tn = cand
                break

    def vmem_estimate(tm_, tn_):
        x_b = 2 * tm_ * D * x.dtype.itemsize
        w_b = 2 * D * tn_ * wt_pad.dtype.itemsize
        o_b = 2 * tm_ * tn_ * out_itemsize
        return x_b + w_b + o_b

    # Shrink tn (only if W is not resident) then tm until we fit the budget.
    while (not resident_w) and tn > 128 and vmem_estimate(8, tn) > _TILE_BUDGET_BYTES:
        tn //= 2
    while tm > 8 and vmem_estimate(tm, tn) > _TILE_BUDGET_BYTES:
        tm = max(8, _round_up(tm // 2, 8))

    B_pad = _round_up(B, tm)
    x_p = x if B_pad == B else jnp.pad(x, ((0, B_pad - B), (0, 0)))

    if resident_w:
        grid = (B_pad // tm,)
        in_specs = [
            pl.BlockSpec((tm, D), lambda i: (i, 0)),        # x tile, full D
            pl.BlockSpec((D, K_pad), lambda i: (0, 0)),     # W^T resident
        ]
        out_specs = pl.BlockSpec((tm, K_pad), lambda i: (i, 0))
        dims = ("parallel",)
    else:
        grid = (B_pad // tm, K_pad // tn)
        in_specs = [
            pl.BlockSpec((tm, D), lambda i, j: (i, 0)),     # x tile, full D
            pl.BlockSpec((D, tn), lambda i, j: (0, j)),     # W^T tile, full D
        ]
        out_specs = pl.BlockSpec((tm, tn), lambda i, j: (i, j))
        dims = ("parallel", "parallel")

    out = pl.pallas_call(
        _fused_prototypes_kernel,
        out_shape=jax.ShapeDtypeStruct((B_pad, K_pad), out_dtype),
        grid_spec=pltpu.PrefetchScalarGridSpec(
            num_scalar_prefetch=0,
            grid=grid,
            in_specs=in_specs,
            out_specs=out_specs,
        ),
        compiler_params=pltpu.CompilerParams(
            dimension_semantics=dims,
            vmem_limit_bytes=_VMEM_LIMIT_BYTES,
        ),
    )(x_p, wt_pad)

    if B_pad != B or K_pad != k_total:
        out = out[:B, :k_total]
    return out


class MultiPrototypes:
    """JAX/Pallas port of the PyTorch MultiPrototypes module (fused heads)."""

    def __init__(self, output_dim, nmb_prototypes, key,
                 compute_dtype=jnp.bfloat16, out_dtype=jnp.float32,
                 force_pallas=False):
        self.nmb_heads = len(nmb_prototypes)
        self.split_sizes = tuple(int(k) for k in nmb_prototypes)
        self.k_total = sum(self.split_sizes)
        self.out_dtype = out_dtype
        self.force_pallas = force_pallas

        keys = jax.random.split(key, self.nmb_heads)
        bound = 1.0 / (output_dim ** 0.5)
        self.weights = []  # per-head [K_i, D] float32 (nn.Linear layout)
        for k, subkey in zip(nmb_prototypes, keys):
            w = jax.random.uniform(subkey, (k, output_dim), dtype=jnp.float32,
                                   minval=-bound, maxval=bound)
            self.weights.append(w)

        # Fused, pre-transposed, pre-cast, pre-padded slab [D, K_pad].
        wt = jnp.concatenate(self.weights, axis=0).T.astype(compute_dtype)
        self.k_pad = _round_up(self.k_total, 128)
        if self.k_pad != self.k_total:
            wt = jnp.pad(wt, ((0, 0), (0, self.k_pad - self.k_total)))
        self.wt_pad = wt

    def forward_fused(self, x):
        """Fused [B, K_total] slab + per-head offsets (no per-head slice copies)."""
        fused = fused_prototypes_matmul(x, self.wt_pad, self.k_total,
                                        out_dtype=self.out_dtype,
                                        force_pallas=self.force_pallas)
        offsets, off = [], 0
        for k in self.split_sizes:
            offsets.append((off, k))
            off += k
        return fused, offsets

    def __call__(self, x):
        # Matches nn.Module semantics: list of per-head outputs.  (Prefer
        # forward_fused() downstream to skip the per-head slice copies.)
        fused, offsets = self.forward_fused(x)
        return [fused[:, off:off + k] for off, k in offsets]


if __name__ == "__main__":
    key = jax.random.PRNGKey(0)
    k_x, k_params = jax.random.split(key)

    batch = 16
    output_dim = 32
    nmb_prototypes = [128, 64, 256]

    x = jax.random.normal(k_x, (batch, output_dim), dtype=jnp.float32)

    # force_pallas=True so the demo exercises the Pallas kernel (the default
    # fast path would hand these tiny shapes to plain XLA).
    model = MultiPrototypes(output_dim, nmb_prototypes, k_params,
                            force_pallas=True)
    outs = model(x)
    outs = [jax.block_until_ready(o) for o in outs]

    # Tight check: same bf16-quantized inputs, f32 accumulation.
    xq = x.astype(jnp.bfloat16).astype(jnp.float32)
    for o, w, k in zip(outs, model.weights, nmb_prototypes):
        assert o.shape == (batch, k), (o.shape, (batch, k))
        wq = w.astype(jnp.bfloat16).astype(jnp.float32)
        ref_q = xq @ wq.T
        assert jnp.allclose(o, ref_q, atol=1e-4, rtol=1e-4), \
            "mismatch vs bf16-quantized reference"
        # Loose check vs full-f32 reference (module-level semantics).
        ref_f32 = x @ w.T
        assert jnp.allclose(o, ref_f32, atol=1e-1, rtol=1e-1), \
            "mismatch vs f32 reference"

    print("KERNEL_OK")
</pallas_src>

<mosaic_0001>
module attributes {stable_mosaic.version = 11 : i64} {
  func.func @_fused_prototypes_kernel(%arg0: i32, %arg1: memref<16x32xf32, #tpu.memory_space<vmem>>, %arg2: memref<32x512xbf16, #tpu.memory_space<vmem>>, %arg3: memref<16x512xf32, #tpu.memory_space<vmem>>) attributes {dimension_semantics = [#tpu.dimension_semantics<parallel>], iteration_bounds = array<i64: 1>, scalar_prefetch = 0 : i64, scratch_operands = 0 : i64, tpu.core_type = #tpu.core_type<tc>, window_params = [{transform_indices = @transform_0, window_bounds = array<i64: 16, 32>}, {pipeline_mode = #tpu.pipeline_mode<synchronous>, transform_indices = @transform_1, window_bounds = array<i64: 32, 512>}, {transform_indices = @transform_2, window_bounds = array<i64: 16, 512>}]} {
    %c0 = arith.constant 0 : index
    %c0_0 = arith.constant 0 : index
    %0 = vector.load %arg1[%c0, %c0_0] : memref<16x32xf32, #tpu.memory_space<vmem>>, vector<16x32xf32>
    %1 = arith.truncf %0 : vector<16x32xf32> to vector<16x32xbf16>
    %c0_1 = arith.constant 0 : index
    %c0_2 = arith.constant 0 : index
    %2 = vector.load %arg2[%c0_1, %c0_2] : memref<32x512xbf16, #tpu.memory_space<vmem>>, vector<32x512xbf16>
    %cst = arith.constant dense<0.000000e+00> : vector<16x512xf32>
    %3 = tpu.matmul %1, %2, %cst {dimension_numbers = #tpu.dot_dimension_numbers<[1], [0], [0], [1], [0, 0, 1, 1], [], []>} : vector<16x32xbf16>, vector<32x512xbf16>, vector<16x512xf32> -> vector<16x512xf32>
    %c0_3 = arith.constant 0 : index
    %c0_4 = arith.constant 0 : index
    %4 = vector.load %arg3[%c0_3, %c0_4] : memref<16x512xf32, #tpu.memory_space<vmem>>, vector<16x512xf32>
    tpu.vector_store %arg3[%c0_3, %c0_4], %3 {strides = array<i32>} : memref<16x512xf32, #tpu.memory_space<vmem>>, vector<16x512xf32>,
    return
  }
  func.func @transform_0(%arg0: i32) -> (i32, i32) {
    %c0_i32 = arith.constant 0 : i32
    %c0_i32_0 = arith.constant 0 : i32
    return %arg0, %c0_i32 : i32, i32
  }
  func.func @transform_1(%arg0: i32) -> (i32, i32) {
    %c0_i32 = arith.constant 0 : i32
    %c0_i32_0 = arith.constant 0 : i32
    %c0_i32_1 = arith.constant 0 : i32
    return %c0_i32, %c0_i32_0 : i32, i32
  }
  func.func @transform_2(%arg0: i32) -> (i32, i32) {
    %c0_i32 = arith.constant 0 : i32
    %c0_i32_0 = arith.constant 0 : i32
    return %arg0, %c0_i32 : i32, i32
  }
}

</mosaic_0001>

<llo_original>
// kernel: tpu_custom_call.1
$region0: #{tpu_custom_call.1}
  #allocation0 [shape = 'u32[]', space=smem, size = 0x4, offset = 0x4, fixed_abs, tag = 'smem constant byte address 0x4 - core index']
  #allocation1 [shape = 'u32[72,128]{1,0:T(1,128)}', space=vmem, size = 0x9000, scoped, tag = 'internal scratch']
  %s0 = inlined_call_operand.hbm [shape: f32[16,32], index: 0, kind: input, shape index: {}]
  %s1 = inlined_call_operand.hbm [shape: bf16[32,512], index: 1, kind: input, shape index: {}]
  %s2 = inlined_call_operand.hbm [shape: f32[16,512], index: 2, kind: output, shape index: {}]
  %s3 = sld [smem:[#allocation0]]
  $region26: #{tpu_custom_call.1} parent=0
    _
  %s5 = ssub.s32 1, %s3
  %s6 = scalar_select 0, %s5, %s3
  $region1: #{tpu_custom_call.1} parent=0
    #allocation2 [shape = 'u8[8192]{0}', space=vmem, size = 0x2000, scoped, tag = 'input window, operand 0, single buffered']
    #allocation3 [shape = 's32[1]{0}', space=sflag, size = 0x4, scoped, tag = 'scoped memory for tpu_custom_call.1']
    #allocation4 [shape = 's32[1]{0}', space=sflag, size = 0x4, scoped, tag = 'scoped memory for tpu_custom_call.1']
    #allocation5 [shape = 'u8[32768]{0}', space=vmem, size = 0x8000, scoped, tag = 'input window, operand 1, single buffered']
    #allocation6 [shape = 's32[1]{0}', space=sflag, size = 0x4, scoped, tag = 'scoped memory for tpu_custom_call.1']
    #allocation7 [shape = 'u8[32768]{0}', space=vmem, size = 0x8000, scoped, tag = 'output window, operand 0, single buffered']
    %7 = vsyncpa [#allocation3], 0
    %8 = vsyncpa [#allocation6], 0
    %9 = vsyncpa [#allocation4], 0
    // Predicated region
    $region2: #{tpu_custom_call.1} parent=1 // pred_check
      _
    $region3: #{tpu_custom_call.1} parent=1 // pred_check_branch
      %11 = sbr.rel (0) target = $region5
    $region4: #{tpu_custom_call.1} parent=1 // pred_region
      %13 = vsyncadd [#allocation3], 0
      %s14 = sshll.u32 %s0, 4
      %s15 = int_to_ptr.hbm [resolvable:$true] %s14
      %s16 = sshll.u32 [#allocation2], 4
      %s17 = int_to_ptr.vmem [resolvable:$true] %s16
      %22 = dma.hbm_to_vmem [thread:$0]  %s15, 256, %s17, [#allocation3], 128, 128, 8
    $region5: #{tpu_custom_call.1} parent=1 // pred_fallthru
      _
    // Predicated region
    $region6: #{tpu_custom_call.1} parent=1 // pred_check
      _
    $region7: #{tpu_custom_call.1} parent=1 // pred_check_branch
      %24 = sbr.rel (0) target = $region9
    $region8: #{tpu_custom_call.1} parent=1 // pred_region
      %26 = vsyncadd [#allocation6], 0
      %s27 = sshll.u32 %s1, 4
      %s28 = int_to_ptr.hbm [resolvable:$true] %s27
      %s29 = sshll.u32 [#allocation5], 4
      %s30 = int_to_ptr.vmem [resolvable:$true] %s29
      %35 = dma.hbm_to_vmem [thread:$0]  %s28, 1024, %s30, [#allocation6], 256, 256, 16
    $region9: #{tpu_custom_call.1} parent=1 // pred_fallthru
      _
    // Predicated region
    $region10: #{tpu_custom_call.1} parent=1 // pred_check
      _
    $region11: #{tpu_custom_call.1} parent=1 // pred_check_branch
      %37 = sbr.rel (0) target = $region13
    $region12: #{tpu_custom_call.1} parent=1 // pred_region
      %39 = dma.done [#allocation3], 256
    $region13: #{tpu_custom_call.1} parent=1 // pred_fallthru
      _
    // Predicated region
    $region14: #{tpu_custom_call.1} parent=1 // pred_check
      _
    $region15: #{tpu_custom_call.1} parent=1 // pred_check_branch
      %41 = sbr.rel (0) target = $region17
    $region16: #{tpu_custom_call.1} parent=1 // pred_region
      %43 = dma.done [#allocation6], 1024
    $region17: #{tpu_custom_call.1} parent=1 // pred_fallthru
      _
    %v45 = vld [vmem:[#allocation2] sm:$0xff]
    %v46 = vld [vmem:[#allocation2 + $0x8] sm:$0xff]
    %v47 = vpack.c.bf16 %v46, %v45
    %v48 = vld [vmem:[#allocation5] sm:$0xff]
    %v49 = vld [vmem:[#allocation5 + $0x8] sm:$0xff]
    %v50 = vld [vmem:[#allocation5 + $0x10] sm:$0xff]
    %v51 = vld [vmem:[#allocation5 + $0x18] sm:$0xff]
    %v52 = vld [vmem:[#allocation5 + $0x20] sm:$0xff]
    %v53 = vld [vmem:[#allocation5 + $0x28] sm:$0xff]
    %v54 = vld [vmem:[#allocation5 + $0x30] sm:$0xff]
    %v55 = vld [vmem:[#allocation5 + $0x38] sm:$0xff]
    %v64 = vunpack.c.l.b16 %v48
    %v65 = vunpack.c.h.b16 %v48
    %v66 = vunpack.c.l.b16 %v49
    %v67 = vunpack.c.h.b16 %v49
    %v68 = vunpack.c.l.b16 %v50
    %v69 = vunpack.c.h.b16 %v50
    %v70 = vunpack.c.l.b16 %v51
    %v71 = vunpack.c.h.b16 %v51
    %v72 = vunpack.c.l.b16 %v52
    %v73 = vunpack.c.h.b16 %v52
    %v74 = vunpack.c.l.b16 %v53
    %v75 = vunpack.c.h.b16 %v53
    %v76 = vunpack.c.l.b16 %v54
    %v77 = vunpack.c.h.b16 %v54
    %v78 = vunpack.c.l.b16 %v55
    %v79 = vunpack.c.h.b16 %v55
    %v80 = vpack.c.b16 %v68, %v64
    %v81 = vpack.c.b16 %v69, %v65
    %v82 = vpack.c.b16 %v70, %v66
    %v83 = vpack.c.b16 %v71, %v67
    %v84 = vpack.c.b16 %v76, %v72
    %v85 = vpack.c.b16 %v77, %v73
    %v86 = vpack.c.b16 %v78, %v74
    %v87 = vpack.c.b16 %v79, %v75
    %vm96 = vcmask 261120
    %v98 = vsel %vm96, %v47, 0
    %100 = vmatpush.bf16.msra.mxu0 0
    %101 = vmatpush.bf16.msra.mxu0 0
    %102 = vmatpush.bf16.msra.mxu0 0
    %103 = vmatpush.bf16.msra.mxu0 0
    %104 = vmatpush.bf16.msra.mxu0 0
    %105 = vmatpush.bf16.msra.mxu0 0
    %106 = vmatpush.bf16.msra.mxu0 %v84
    %107 = vmatpush.bf16.msra.mxu0 %v80
    %108 = vmatmul.bf16.gmra.mxu0 %v98
    %v109 = vpop.f32.mrf.mxu0
    %v110 = vadd.f32 0.0, %v109
    %v111 = vpop.f32.mrf.mxu0
    %v112 = vadd.f32 0.0, %v111
    %113 = vdwg.mxu0
    %114 = vmatpush.bf16.msra.mxu0 0
    %115 = vmatpush.bf16.msra.mxu0 0
    %116 = vmatpush.bf16.msra.mxu0 0
    %117 = vmatpush.bf16.msra.mxu0 0
    %118 = vmatpush.bf16.msra.mxu0 0
    %119 = vmatpush.bf16.msra.mxu0 0
    %120 = vmatpush.bf16.msra.mxu0 %v85
    %121 = vmatpush.bf16.msra.mxu0 %v81
    %122 = vmatmul.bf16.gmra.mxu0 %v98
    %v123 = vpop.f32.mrf.mxu0
    %v124 = vadd.f32 0.0, %v123
    %v125 = vpop.f32.mrf.mxu0
    %v126 = vadd.f32 0.0, %v125
    %127 = vdwg.mxu0
    %128 = vmatpush.bf16.msra.mxu0 0
    %129 = vmatpush.bf16.msra.mxu0 0
    %130 = vmatpush.bf16.msra.mxu0 0
    %131 = vmatpush.bf16.msra.mxu0 0
    %132 = vmatpush.bf16.msra.mxu0 0
    %133 = vmatpush.bf16.msra.mxu0 0
    %134 = vmatpush.bf16.msra.mxu0 %v86
    %135 = vmatpush.bf16.msra.mxu0 %v82
    %136 = vmatmul.bf16.gmra.mxu0 %v98
    %v137 = vpop.f32.mrf.mxu0
    %v138 = vadd.f32 0.0, %v137
    %v139 = vpop.f32.mrf.mxu0
    %v140 = vadd.f32 0.0, %v139
    %141 = vdwg.mxu0
    %142 = vmatpush.bf16.msra.mxu0 0
    %143 = vmatpush.bf16.msra.mxu0 0
    %144 = vmatpush.bf16.msra.mxu0 0
    %145 = vmatpush.bf16.msra.mxu0 0
    %146 = vmatpush.bf16.msra.mxu0 0
    %147 = vmatpush.bf16.msra.mxu0 0
    %148 = vmatpush.bf16.msra.mxu0 %v87
    %149 = vmatpush.bf16.msra.mxu0 %v83
    %150 = vmatmul.bf16.gmra.mxu0 %v98
    %v151 = vpop.f32.mrf.mxu0
    %v152 = vadd.f32 0.0, %v151
    %v153 = vpop.f32.mrf.mxu0
    %v154 = vadd.f32 0.0, %v153
    %155 = vdwg.mxu0
    %156 = vst [vmem:[#allocation7] sm:$0xff] %v110
    %157 = vst [vmem:[#allocation7 + $0x8] sm:$0xff] %v124
    %158 = vst [vmem:[#allocation7 + $0x10] sm:$0xff] %v138
    %159 = vst [vmem:[#allocation7 + $0x18] sm:$0xff] %v152
    %160 = vst [vmem:[#allocation7 + $0x20] sm:$0xff] %v112
    %161 = vst [vmem:[#allocation7 + $0x28] sm:$0xff] %v126
    %162 = vst [vmem:[#allocation7 + $0x30] sm:$0xff] %v140
    %163 = vst [vmem:[#allocation7 + $0x38] sm:$0xff] %v154
    // Predicated region
    $region18: #{tpu_custom_call.1} parent=1 // pred_check
      _
    $region19: #{tpu_custom_call.1} parent=1 // pred_check_branch
      %165 = sbr.rel (0) target = $region21
    $region20: #{tpu_custom_call.1} parent=1 // pred_region
      %167 = vsyncadd [#allocation4], 0
      %s168 = sshll.u32 [#allocation7], 4
      %s169 = int_to_ptr.vmem [resolvable:$true] %s168
      %s170 = sshll.u32 %s2, 4
      %s171 = int_to_ptr.hbm [resolvable:$true] %s170
      %176 = dma.vmem_to_hbm [thread:$0]  %s169, 1024, %s171, [#allocation4], 512, 512, 32
    $region21: #{tpu_custom_call.1} parent=1 // pred_fallthru
      _
    // Predicated region
    $region22: #{tpu_custom_call.1} parent=1 // pred_check
      _
    $region23: #{tpu_custom_call.1} parent=1 // pred_check_branch
      %178 = sbr.rel (0) target = $region25
    $region24: #{tpu_custom_call.1} parent=1 // pred_region
      %180 = dma.done [#allocation4], 1024
    $region25: #{tpu_custom_call.1} parent=1 // pred_fallthru
      _
    %181 = vsyncpa [#allocation3], 1
    %182 = vsyncpa [#allocation6], 1
    %183 = vsyncpa [#allocation4], 1

</llo_original>
